<compile_context>
chip_gen: v7x
topology: tpu7x:2x2x1
jax: 0.10.0
libtpu: 0.0.40
codegen_flags: <defaults>
</compile_context>

<pallas_src>
import functools

import jax
import jax.numpy as jnp
from jax.experimental import pallas as pl
from jax.experimental.pallas import tpu as pltpu


# ---------------------------------------------------------------------------
# Kernel
# ---------------------------------------------------------------------------

def _mlp_kernel(num_layers, d_in, slab, n_slabs, gen_coords, coord_hw,
                clip_output, *refs):
    """Fused INR MLP on one (d_out, tile_n) feature-major output tile.

    refs = ([x_ref,] W0, b0, W1, b1, ..., Wn, bn, out_ref)
      x_ref : (d_in, tile_n)   feature-major input tile (absent if gen_coords)
      W0    : (d_h0, d_in) f32 first layer kept f32 (coordinate precision)
      Wi>0  : (d_i, d_{i-1})   pre-cast to the matmul dtype in the wrapper
      bi    : (d_i, 1) f32
      out   : (d_out, tile_n)
    """
    if gen_coords:
        x_ref = None
        param_refs = refs[:-1]
    else:
        x_ref = refs[0]
        param_refs = refs[1:-1]
    out_ref = refs[-1]

    # Hoist the tiny weight / bias loads out of the sub-slab loop.
    ws = [param_refs[2 * i][...] for i in range(num_layers)]
    bs = [param_refs[2 * i + 1][...] for i in range(num_layers)]
    w0 = ws[0].astype(jnp.float32)
    b0 = bs[0]

    tile_n = n_slabs * slab
    tile_col0 = pl.program_id(0) * tile_n

    def do_slab(s):
        col = s * slab
        if not isinstance(col, int):
            col = pl.multiple_of(col, slab)

        # ---- layer-0 input rows, always f32 ------------------------------
        if gen_coords:
            h_res, w_res = coord_hw
            # Global column index j of the flattened coordinate list; coords
            # are ((j // h) / (w-1), (j % h) / (h-1)), matching
            # torch.meshgrid(linspace(0,1,w), linspace(0,1,h)).reshape(-1, 2).
            idx = (tile_col0 + col
                   + jax.lax.broadcasted_iota(jnp.int32, (1, slab), 1))
            idx_f = idx.astype(jnp.float32)          # exact for idx < 2**24
            r = jnp.floor(idx_f * (1.0 / h_res))
            c = idx_f - r * h_res
            # Guard against a float-rounding off-by-one in the floor-div.
            hi = c >= jnp.float32(h_res)
            lo = c < 0.0
            r = jnp.where(hi, r + 1.0, jnp.where(lo, r - 1.0, r))
            c = jnp.where(hi, c - h_res, jnp.where(lo, c + h_res, c))
            sx = 1.0 / (w_res - 1) if w_res > 1 else 0.0
            sy = 1.0 / (h_res - 1) if h_res > 1 else 0.0
            x_rows = [r * sx, c * sy]                # each (1, slab), f32
            x = None
        else:
            x = x_ref[:, pl.ds(col, slab)].astype(jnp.float32)
            x_rows = ([x[k:k + 1, :] for k in range(d_in)]
                      if d_in <= 8 else None)

        # ---- layer 0: VPU broadcast-FMA for tiny K, f32 throughout -------
        if x_rows is not None:
            h = b0
            for k in range(len(x_rows)):             # static, fully unrolled
                h = h + w0[:, k:k + 1] * x_rows[k]
        else:
            h = jnp.dot(w0, x, preferred_element_type=jnp.float32) + b0
        if num_layers > 1:
            h = jnp.maximum(h, 0.0)

        # ---- layers 1..n-1: MXU matmuls, f32 accumulate / bias / ReLU -----
        for i in range(1, num_layers):
            w = ws[i]
            h = jnp.dot(w, h.astype(w.dtype),
                        preferred_element_type=jnp.float32) + bs[i]
            if i < num_layers - 1:
                h = jnp.maximum(h, 0.0)

        if clip_output:
            h = jnp.clip(h, 0.0, 1.0)
        out_ref[:, pl.ds(col, slab)] = h.astype(out_ref.dtype)

    if n_slabs == 1:
        do_slab(0)
    else:
        @pl.loop(0, n_slabs)
        def _(s):
            do_slab(s)


# ---------------------------------------------------------------------------
# Wrappers
# ---------------------------------------------------------------------------

def _round_up(n, m):
    return ((n + m - 1) // m) * m


def _choose_tiles(n, tile_n, slab):
    slab = max(128, (slab // 128) * 128)
    n_rounded = _round_up(max(n, 1), slab)
    tile_n = max(slab, (tile_n // slab) * slab)
    tile_n = min(tile_n, n_rounded)          # don't pad past the problem size
    return tile_n, slab, tile_n // slab


def _prep_params(params, matmul_dtype):
    """Flatten params, reshape biases to (d, 1), pre-cast hidden weights."""
    flat, specs = [], []
    for i, (w, b) in enumerate(params):
        w = jnp.asarray(w, jnp.float32)
        if i > 0:                               # layer 0 stays f32 (coords)
            w = w.astype(matmul_dtype)
        b = jnp.asarray(b, jnp.float32).reshape(-1, 1)
        flat += [w, b]
        specs += [pl.BlockSpec(w.shape, lambda i_: (0, 0)),
                  pl.BlockSpec(b.shape, lambda i_: (0, 0))]
    return flat, specs


def inr_forward_fm(x_fm, params, *, tile_n=4096, slab=512,
                   matmul_dtype=jnp.bfloat16, out_dtype=jnp.float32,
                   clip_output=False):
    """Feature-major INR forward: x_fm (D_in, N) -> (D_out, N). No transposes."""
    d_in, n = x_fm.shape
    num_layers = len(params)
    d_out = params[-1][0].shape[0]

    tile_n, slab, n_slabs = _choose_tiles(n, tile_n, slab)
    n_pad = _round_up(n, tile_n)
    if n_pad != n:
        x_fm = jnp.pad(x_fm, ((0, 0), (0, n_pad - n)))

    flat_params, param_specs = _prep_params(params, matmul_dtype)
    kernel = functools.partial(_mlp_kernel, num_layers, d_in, slab, n_slabs,
                               False, None, clip_output)
    out = pl.pallas_call(
        kernel,
        out_shape=jax.ShapeDtypeStruct((d_out, n_pad), out_dtype),
        grid=(n_pad // tile_n,),
        in_specs=[pl.BlockSpec((d_in, tile_n), lambda i: (0, i))] + param_specs,
        out_specs=pl.BlockSpec((d_out, tile_n), lambda i: (0, i)),
        compiler_params=pltpu.CompilerParams(
            dimension_semantics=("parallel",)),
    )(x_fm, *flat_params)
    return out[:, :n] if n_pad != n else out


def inr_forward(x, params, **kw):
    """PyTorch-layout convenience wrapper: x (N, D_in) -> (N, D_out).
    For large N prefer inr_forward_fm / generate_image (no wrapper transposes)."""
    return jnp.transpose(inr_forward_fm(jnp.transpose(x), params, **kw))


def generate_image(params, resolution, *, tile_n=4096, slab=512,
                   matmul_dtype=jnp.bfloat16, out_dtype=jnp.float32):
    """INRModel.generate_image_tensor: coordinates synthesized in-kernel,
    [0,1] clip fused into the epilogue. Returns (h, w, 3)."""
    h_res, w_res = resolution
    assert params[0][0].shape[1] == 2, "generate_image expects 2-D coordinates"
    n = h_res * w_res
    num_layers = len(params)
    d_out = params[-1][0].shape[0]

    tile_n, slab, n_slabs = _choose_tiles(n, tile_n, slab)
    n_pad = _round_up(n, tile_n)

    flat_params, param_specs = _prep_params(params, matmul_dtype)
    kernel = functools.partial(_mlp_kernel, num_layers, 2, slab, n_slabs,
                               True, (h_res, w_res), True)
    out = pl.pallas_call(
        kernel,
        out_shape=jax.ShapeDtypeStruct((d_out, n_pad), out_dtype),
        grid=(n_pad // tile_n,),
        in_specs=param_specs,
        out_specs=pl.BlockSpec((d_out, tile_n), lambda i: (0, i)),
        compiler_params=pltpu.CompilerParams(
            dimension_semantics=("parallel",)),
    )(*flat_params)
    # (3, w*h) feature-major -> (h, w, 3), matching the PyTorch reshape. This
    # channel-last conversion is the only host-side pass over the result.
    return jnp.transpose(out[:, :n]).reshape(h_res, w_res, d_out)


# ---------------------------------------------------------------------------
# Init / reference
# ---------------------------------------------------------------------------

def init_params(layer_dims, key):
    """nn.Linear-style init: W (fan_out, fan_in), b (fan_out,),
    both U(-1/sqrt(fan_in), 1/sqrt(fan_in))."""
    params = []
    for i in range(len(layer_dims) - 1):
        fan_in, fan_out = layer_dims[i], layer_dims[i + 1]
        key, kw, kb = jax.random.split(key, 3)
        bound = 1.0 / (fan_in ** 0.5)
        w = jax.random.uniform(kw, (fan_out, fan_in), jnp.float32, -bound, bound)
        b = jax.random.uniform(kb, (fan_out,), jnp.float32, -bound, bound)
        params.append((w, b))
    return params


def reference_forward(x, params):
    h = x
    for i, (w, b) in enumerate(params):
        h = jnp.dot(h, w.T, precision=jax.lax.Precision.HIGHEST) + b
        if i < len(params) - 1:
            h = jnp.maximum(h, 0.0)
    return h


# ---------------------------------------------------------------------------
# Demo / checks
# ---------------------------------------------------------------------------

if __name__ == "__main__":
    key = jax.random.PRNGKey(0)

    layer_dims = [2, 32, 32, 3]                    # coords -> RGB INR
    params = init_params(layer_dims, key)

    h_res, w_res = 32, 32
    # Exactly the PyTorch coordinate construction:
    # torch.meshgrid(linspace(0,1,w), linspace(0,1,h)) ('ij'), reshape(-1, 2).
    gx, gy = jnp.meshgrid(jnp.linspace(0.0, 1.0, w_res),
                          jnp.linspace(0.0, 1.0, h_res), indexing="ij")
    coords = jnp.stack([gx, gy], axis=-1).reshape(-1, 2)      # (w*h, 2)

    ref = reference_forward(coords, params)

    # 1) feature-major fast path, exact-ish f32 matmuls in-kernel.
    out_fm = jax.block_until_ready(
        inr_forward_fm(coords.T, params, matmul_dtype=jnp.float32))
    assert out_fm.shape == (layer_dims[-1], h_res * w_res)
    assert jnp.allclose(out_fm.T, ref, atol=1e-4, rtol=1e-4), "f32 fm mismatch"

    # 2) PyTorch-layout wrapper, default bf16 MXU path.
    out = jax.block_until_ready(inr_forward(coords, params))
    assert out.shape == (h_res * w_res, layer_dims[-1])
    assert jnp.allclose(out, ref, atol=3e-2, rtol=3e-2), "bf16 mismatch"

    # 3) ragged N (pad + slice path).
    out_odd = jax.block_until_ready(
        inr_forward(coords[:777], params, matmul_dtype=jnp.float32))
    assert jnp.allclose(out_odd, ref[:777], atol=1e-4, rtol=1e-4), "tail mismatch"

    # 4) generate_image_tensor: in-kernel coordinate synthesis + fused clip.
    ref_img = jnp.clip(ref, 0.0, 1.0).reshape(h_res, w_res, 3)
    img = jax.block_until_ready(
        generate_image(params, (h_res, w_res), matmul_dtype=jnp.float32))
    assert img.shape == (h_res, w_res, 3)
    assert jnp.allclose(img, ref_img, atol=1e-4, rtol=1e-4), "image mismatch"

    # bf16-output variant (halves output store traffic on the fast path).
    img_bf16 = jax.block_until_ready(
        generate_image(params, (h_res, w_res), out_dtype=jnp.bfloat16))
    assert jnp.allclose(img_bf16.astype(jnp.float32), ref_img,
                        atol=3e-2, rtol=3e-2), "bf16 image mismatch"

    print("KERNEL_OK")
</pallas_src>

<mosaic_0001>
module attributes {stable_mosaic.version = 11 : i64} {
  func.func @_mlp_kernel(%arg0: i32, %arg1: memref<2x1024xf32, #tpu.memory_space<vmem>>, %arg2: memref<32x2xf32, #tpu.memory_space<vmem>>, %arg3: memref<32x1xf32, #tpu.memory_space<vmem>>, %arg4: memref<32x32xf32, #tpu.memory_space<vmem>>, %arg5: memref<32x1xf32, #tpu.memory_space<vmem>>, %arg6: memref<3x32xf32, #tpu.memory_space<vmem>>, %arg7: memref<3x1xf32, #tpu.memory_space<vmem>>, %arg8: memref<3x1024xf32, #tpu.memory_space<vmem>>) attributes {dimension_semantics = [#tpu.dimension_semantics<parallel>], iteration_bounds = array<i64: 1>, scalar_prefetch = 0 : i64, scratch_operands = 0 : i64, tpu.core_type = #tpu.core_type<tc>, window_params = [{transform_indices = @transform_0, window_bounds = array<i64: 2, 1024>}, {pipeline_mode = #tpu.pipeline_mode<synchronous>, transform_indices = @transform_1, window_bounds = array<i64: 32, 2>}, {pipeline_mode = #tpu.pipeline_mode<synchronous>, transform_indices = @transform_2, window_bounds = array<i64: 32, 1>}, {pipeline_mode = #tpu.pipeline_mode<synchronous>, transform_indices = @transform_3, window_bounds = array<i64: 32, 32>}, {pipeline_mode = #tpu.pipeline_mode<synchronous>, transform_indices = @transform_4, window_bounds = array<i64: 32, 1>}, {pipeline_mode = #tpu.pipeline_mode<synchronous>, transform_indices = @transform_5, window_bounds = array<i64: 3, 32>}, {pipeline_mode = #tpu.pipeline_mode<synchronous>, transform_indices = @transform_6, window_bounds = array<i64: 3, 1>}, {transform_indices = @transform_7, window_bounds = array<i64: 3, 1024>}]} {
    %c0 = arith.constant 0 : index
    %c0_0 = arith.constant 0 : index
    %0 = vector.load %arg2[%c0, %c0_0] : memref<32x2xf32, #tpu.memory_space<vmem>>, vector<32x2xf32>
    %c0_1 = arith.constant 0 : index
    %c0_2 = arith.constant 0 : index
    %1 = vector.load %arg4[%c0_1, %c0_2] : memref<32x32xf32, #tpu.memory_space<vmem>>, vector<32x32xf32>
    %c0_3 = arith.constant 0 : index
    %c0_4 = arith.constant 0 : index
    %2 = vector.load %arg6[%c0_3, %c0_4] : memref<3x32xf32, #tpu.memory_space<vmem>>, vector<3x32xf32>
    %c0_5 = arith.constant 0 : index
    %c0_6 = arith.constant 0 : index
    %3 = vector.load %arg3[%c0_5, %c0_6] : memref<32x1xf32, #tpu.memory_space<vmem>>, vector<32x1xf32>
    %c0_7 = arith.constant 0 : index
    %c0_8 = arith.constant 0 : index
    %4 = vector.load %arg5[%c0_7, %c0_8] : memref<32x1xf32, #tpu.memory_space<vmem>>, vector<32x1xf32>
    %c0_9 = arith.constant 0 : index
    %c0_10 = arith.constant 0 : index
    %5 = vector.load %arg7[%c0_9, %c0_10] : memref<3x1xf32, #tpu.memory_space<vmem>>, vector<3x1xf32>
    %c0_i32 = arith.constant 0 : i32
    %c2_i32 = arith.constant 2 : i32
    %6 = arith.addi %c0_i32, %c2_i32 : i32
    %c1_i32 = arith.constant 1 : i32
    scf.for %arg9 = %c0_i32 to %6 step %c1_i32  : i32 {
      %c1_i32_12 = arith.constant 1 : i32
      %7 = arith.muli %arg9, %c1_i32_12 : i32
      %c0_i32_13 = arith.constant 0 : i32
      %8 = arith.addi %c0_i32_13, %7 : i32
      %c512_i32 = arith.constant 512 : i32
      %9 = arith.muli %8, %c512_i32 : i32
      %10 = tpu.assume_multiple %9, 512 : i32
      %c0_14 = arith.constant 0 : index
      %11 = arith.index_cast %10 : i32 to index
      %12 = vector.load %arg1[%c0_14, %11] : memref<2x1024xf32, #tpu.memory_space<vmem>>, vector<2x512xf32>
      %13 = vector.extract_strided_slice %12 {offsets = [0, 0], sizes = [1, 512], strides = [1, 1]} : vector<2x512xf32> to vector<1x512xf32>
      %14 = vector.extract_strided_slice %12 {offsets = [1, 0], sizes = [1, 512], strides = [1, 1]} : vector<2x512xf32> to vector<1x512xf32>
      %15 = vector.extract_strided_slice %0 {offsets = [0, 0], sizes = [32, 1], strides = [1, 1]} : vector<32x2xf32> to vector<32x1xf32>
      %16 = vector.broadcast %15 : vector<32x1xf32> to vector<32x512xf32>
      %17 = vector.broadcast %13 : vector<1x512xf32> to vector<32x512xf32>
      %18 = arith.mulf %16, %17 : vector<32x512xf32>
      %19 = vector.broadcast %3 : vector<32x1xf32> to vector<32x512xf32>
      %20 = arith.addf %19, %18 : vector<32x512xf32>
      %21 = vector.extract_strided_slice %0 {offsets = [0, 1], sizes = [32, 1], strides = [1, 1]} : vector<32x2xf32> to vector<32x1xf32>
      %22 = vector.broadcast %21 : vector<32x1xf32> to vector<32x512xf32>
      %23 = vector.broadcast %14 : vector<1x512xf32> to vector<32x512xf32>
      %24 = arith.mulf %22, %23 : vector<32x512xf32>
      %25 = arith.addf %20, %24 : vector<32x512xf32>
      %cst = arith.constant 0.000000e+00 : f32
      %26 = vector.broadcast %cst : f32 to vector<32x512xf32>
      %27 = arith.maximumf %25, %26 : vector<32x512xf32>
      %cst_15 = arith.constant dense<0.000000e+00> : vector<32x512xf32>
      %28 = tpu.matmul %1, %27, %cst_15 {dimension_numbers = #tpu.dot_dimension_numbers<[1], [0], [0], [1], [0, 0, 1, 1], [], []>} : vector<32x32xf32>, vector<32x512xf32>, vector<32x512xf32> -> vector<32x512xf32>
      %29 = vector.broadcast %4 : vector<32x1xf32> to vector<32x512xf32>
      %30 = arith.addf %28, %29 : vector<32x512xf32>
      %cst_16 = arith.constant 0.000000e+00 : f32
      %31 = vector.broadcast %cst_16 : f32 to vector<32x512xf32>
      %32 = arith.maximumf %30, %31 : vector<32x512xf32>
      %cst_17 = arith.constant dense<0.000000e+00> : vector<3x512xf32>
      %33 = tpu.matmul %2, %32, %cst_17 {dimension_numbers = #tpu.dot_dimension_numbers<[1], [0], [0], [1], [0, 0, 1, 1], [], []>} : vector<3x32xf32>, vector<32x512xf32>, vector<3x512xf32> -> vector<3x512xf32>
      %34 = vector.broadcast %5 : vector<3x1xf32> to vector<3x512xf32>
      %35 = arith.addf %33, %34 : vector<3x512xf32>
      %c0_18 = arith.constant 0 : index
      %36 = arith.index_cast %10 : i32 to index
      %37 = vector.load %arg8[%c0_18, %36] : memref<3x1024xf32, #tpu.memory_space<vmem>>, vector<3x512xf32>
      tpu.vector_store %arg8[%c0_18, %36], %35 {strides = array<i32>} : memref<3x1024xf32, #tpu.memory_space<vmem>>, vector<3x512xf32>,
    }
    %c2_i32_11 = arith.constant 2 : i32
    return
  }
  func.func @transform_0(%arg0: i32) -> (i32, i32) {
    %c0_i32 = arith.constant 0 : i32
    %c0_i32_0 = arith.constant 0 : i32
    return %c0_i32, %arg0 : i32, i32
  }
  func.func @transform_1(%arg0: i32) -> (i32, i32) {
    %c0_i32 = arith.constant 0 : i32
    %c0_i32_0 = arith.constant 0 : i32
    %c0_i32_1 = arith.constant 0 : i32
    return %c0_i32, %c0_i32_0 : i32, i32
  }
  func.func @transform_2(%arg0: i32) -> (i32, i32) {
    %c0_i32 = arith.constant 0 : i32
    %c0_i32_0 = arith.constant 0 : i32
    %c0_i32_1 = arith.constant 0 : i32
    return %c0_i32, %c0_i32_0 : i32, i32
  }
  func.func @transform_3(%arg0: i32) -> (i32, i32) {
    %c0_i32 = arith.constant 0 : i32
    %c0_i32_0 = arith.constant 0 : i32
    %c0_i32_1 = arith.constant 0 : i32
    return %c0_i32, %c0_i32_0 : i32, i32
  }
  func.func @transform_4(%arg0: i32) -> (i32, i32) {
    %c0_i32 = arith.constant 0 : i32
    %c0_i32_0 = arith.constant 0 : i32
    %c0_i32_1 = arith.constant 0 : i32
    return %c0_i32, %c0_i32_0 : i32, i32
  }
  func.func @transform_5(%arg0: i32) -> (i32, i32) {
    %c0_i32 = arith.constant 0 : i32
    %c0_i32_0 = arith.constant 0 : i32
    %c0_i32_1 = arith.constant 0 : i32
    return %c0_i32, %c0_i32_0 : i32, i32
  }
  func.func @transform_6(%arg0: i32) -> (i32, i32) {
    %c0_i32 = arith.constant 0 : i32
    %c0_i32_0 = arith.constant 0 : i32
    %c0_i32_1 = arith.constant 0 : i32
    return %c0_i32, %c0_i32_0 : i32, i32
  }
  func.func @transform_7(%arg0: i32) -> (i32, i32) {
    %c0_i32 = arith.constant 0 : i32
    %c0_i32_0 = arith.constant 0 : i32
    return %c0_i32, %arg0 : i32, i32
  }
}

</mosaic_0001>

<llo_original>
// kernel: tpu_custom_call.1
$region0: #{tpu_custom_call.1}
  #allocation0 [shape = 'u32[]', space=smem, size = 0x4, offset = 0x4, fixed_abs, tag = 'smem constant byte address 0x4 - core index']
  #allocation1 [shape = 'u32[144,128]{1,0:T(1,128)}', space=vmem, size = 0x12000, scoped, tag = 'internal scratch']
  %s0 = inlined_call_operand.vmem [shape: f32[2,1024], index: 0, kind: input, shape index: {}]
  %s1 = inlined_call_operand.vmem [shape: f32[32,2], index: 1, kind: input, shape index: {}]
  %s2 = inlined_call_operand.vmem [shape: f32[32,1], index: 2, kind: input, shape index: {}]
  %s3 = inlined_call_operand.vmem [shape: f32[32,32], index: 3, kind: input, shape index: {}]
  %s4 = inlined_call_operand.vmem [shape: f32[32,1], index: 4, kind: input, shape index: {}]
  %s5 = inlined_call_operand.vmem [shape: f32[3,32], index: 5, kind: input, shape index: {}]
  %s6 = inlined_call_operand.vmem [shape: f32[3,1], index: 6, kind: input, shape index: {}]
  %s7 = inlined_call_operand.hbm [shape: f32[3,1024], index: 7, kind: output, shape index: {}]
  %s8 = sld [smem:[#allocation0]]
  $region45: #{tpu_custom_call.1} parent=0
    _
  %s10 = ssub.s32 1, %s8
  %s11 = scalar_select 0, %s10, %s8
  $region1: #{tpu_custom_call.1} parent=0
    #allocation2 [shape = 'u8[16384]{0}', space=vmem, size = 0x4000, scoped, tag = 'output window, operand 0, single buffered']
    #allocation3 [shape = 's32[1]{0}', space=sflag, size = 0x4, scoped, tag = 'scoped memory for tpu_custom_call.1']
    %12 = vsyncpa [#allocation3], 0
    // Predicated region
    $region2: #{tpu_custom_call.1} parent=1 // pred_check
      _
    $region3: #{tpu_custom_call.1} parent=1 // pred_check_branch
      %14 = sbr.rel (0) target = $region5
    $region4: #{tpu_custom_call.1} parent=1 // pred_region
      _
    $region5: #{tpu_custom_call.1} parent=1 // pred_fallthru
      _
    // Predicated region
    $region6: #{tpu_custom_call.1} parent=1 // pred_check
      _
    $region7: #{tpu_custom_call.1} parent=1 // pred_check_branch
      %16 = sbr.rel (0) target = $region9
    $region8: #{tpu_custom_call.1} parent=1 // pred_region
      _
    $region9: #{tpu_custom_call.1} parent=1 // pred_fallthru
      _
    // Predicated region
    $region10: #{tpu_custom_call.1} parent=1 // pred_check
      _
    $region11: #{tpu_custom_call.1} parent=1 // pred_check_branch
      %18 = sbr.rel (0) target = $region13
    $region12: #{tpu_custom_call.1} parent=1 // pred_region
      _
    $region13: #{tpu_custom_call.1} parent=1 // pred_fallthru
      _
    // Predicated region
    $region14: #{tpu_custom_call.1} parent=1 // pred_check
      _
    $region15: #{tpu_custom_call.1} parent=1 // pred_check_branch
      %20 = sbr.rel (0) target = $region17
    $region16: #{tpu_custom_call.1} parent=1 // pred_region
      _
    $region17: #{tpu_custom_call.1} parent=1 // pred_fallthru
      _
    // Predicated region
    $region18: #{tpu_custom_call.1} parent=1 // pred_check
      _
    $region19: #{tpu_custom_call.1} parent=1 // pred_check_branch
      %22 = sbr.rel (0) target = $region21
    $region20: #{tpu_custom_call.1} parent=1 // pred_region
      _
    $region21: #{tpu_custom_call.1} parent=1 // pred_fallthru
      _
    // Predicated region
    $region22: #{tpu_custom_call.1} parent=1 // pred_check
      _
    $region23: #{tpu_custom_call.1} parent=1 // pred_check_branch
      %24 = sbr.rel (0) target = $region25
    $region24: #{tpu_custom_call.1} parent=1 // pred_region
      _
    $region25: #{tpu_custom_call.1} parent=1 // pred_fallthru
      _
    // Predicated region
    $region26: #{tpu_custom_call.1} parent=1 // pred_check
      _
    $region27: #{tpu_custom_call.1} parent=1 // pred_check_branch
      %26 = sbr.rel (0) target = $region29
    $region28: #{tpu_custom_call.1} parent=1 // pred_region
      _
    $region29: #{tpu_custom_call.1} parent=1 // pred_fallthru
      _
    %v27 = vld [vmem:[%s1] sm:$0xff]
    %v28 = vld [vmem:[%s1 + $0x8] sm:$0xff]
    %v29 = vld [vmem:[%s1 + $0x10] sm:$0xff]
    %v30 = vld [vmem:[%s1 + $0x18] sm:$0xff]
    %v31 = vld [vmem:[%s3] sm:$0xff]
    %v32 = vld [vmem:[%s3 + $0x8] sm:$0xff]
    %v33 = vld [vmem:[%s3 + $0x10] sm:$0xff]
    %v34 = vld [vmem:[%s3 + $0x18] sm:$0xff]
    %v35 = vld [vmem:[%s5] sm:$0x7]
    %v36 = vld [vmem:[%s2] sm:$0xff]
    %v37 = vld [vmem:[%s2 + $0x8] sm:$0xff]
    %v38 = vld [vmem:[%s2 + $0x10] sm:$0xff]
    %v39 = vld [vmem:[%s2 + $0x18] sm:$0xff]
    %v40 = vld [vmem:[%s4] sm:$0xff]
    %v41 = vld [vmem:[%s4 + $0x8] sm:$0xff]
    %v42 = vld [vmem:[%s4 + $0x10] sm:$0xff]
    %v43 = vld [vmem:[%s4 + $0x18] sm:$0xff]
    %v44 = vld [vmem:[%s6] sm:$0x7]
    loop: start=0, step=1, limit=2
    $region30: #{tpu_custom_call.1} parent=1 // loop_pre_header
      _
    $region31: #{tpu_custom_call.1} parent=1 // loop_header
      %s46 = sphi 0, %s50
      %p47 = scmp.ge.s32.totalorder %s46, 2
    $region32: #{tpu_custom_call.1} parent=1 // loop_header_branch
      %49 = sbr.rel (%p47) target = $region36
    $region33: #{tpu_custom_call.1} parent=1 // loop_body
      %s51 = smul.u32 %s46, 512
      %s52 = sshra.s32 %s51, 7
      %s53 = sand.u32 %s51, 127
      %s54 = smul.addr %s52, 2
      %s55 = scalar_lea.vmem %s0, %s54
      %v56 = vld [vmem:[%s55] sm:$0xff]
      %58 = vset.pattern.permute.xlu0 0
      %59 = vperm.xlu0 %58, %v27
      %v60 = vpop.permute.xlu0 %59
      %63 = vset.pattern.permute.xlu0 0
      %64 = vperm.xlu0 %63, %v28
      %v65 = vpop.permute.xlu0 %64
      %68 = vset.pattern.permute.xlu0 0
      %69 = vperm.xlu0 %68, %v29
      %v70 = vpop.permute.xlu0 %69
      %73 = vset.pattern.permute.xlu0 0
      %74 = vperm.xlu0 %73, %v30
      %v75 = vpop.permute.xlu0 %74
      %v78 = vlaneseq
      %v79 = vshrl.u32 %v78, 7
      %v80 = vsub.s32 0, %v79
      %v81 = vrot.slane %v56, %v80
      %v82 = vlaneseq
      %v83 = vshrl.u32 %v82, 7
      %v84 = vsub.s32 2, %v83
      %v85 = vrot.slane %v56, %v84
      %v86 = vlaneseq
      %v87 = vshrl.u32 %v86, 7
      %v88 = vsub.s32 4, %v87
      %v89 = vrot.slane %v56, %v88
      %v90 = vlaneseq
      %v91 = vshrl.u32 %v90, 7
      %v92 = vsub.s32 6, %v91
      %v93 = vrot.slane %v56, %v92
      %v98 = vlaneseq
      %v99 = vshrl.u32 %v98, 7
      %v100 = vsub.s32 0, %v99
      %v101 = vrot.slane %v81, %v100
      %v102 = vlaneseq
      %v103 = vshrl.u32 %v102, 7
      %v104 = vsub.s32 0, %v103
      %v105 = vrot.slane %v85, %v104
      %v106 = vlaneseq
      %v107 = vshrl.u32 %v106, 7
      %v108 = vsub.s32 0, %v107
      %v109 = vrot.slane %v89, %v108
      %v110 = vlaneseq
      %v111 = vshrl.u32 %v110, 7
      %v112 = vsub.s32 0, %v111
      %v113 = vrot.slane %v93, %v112
      %v114 = vmul.f32 %v60, %v101
      %v115 = vmul.f32 %v60, %v105
      %v116 = vmul.f32 %v60, %v109
      %v117 = vmul.f32 %v60, %v113
      %v118 = vmul.f32 %v65, %v101
      %v119 = vmul.f32 %v65, %v105
      %v120 = vmul.f32 %v65, %v109
      %v121 = vmul.f32 %v65, %v113
      %v122 = vmul.f32 %v70, %v101
      %v123 = vmul.f32 %v70, %v105
      %v124 = vmul.f32 %v70, %v109
      %v125 = vmul.f32 %v70, %v113
      %v126 = vmul.f32 %v75, %v101
      %v127 = vmul.f32 %v75, %v105
      %v128 = vmul.f32 %v75, %v109
      %v129 = vmul.f32 %v75, %v113
      %131 = vset.pattern.permute.xlu0 0
      %132 = vperm.xlu0 %131, %v36
      %v133 = vpop.permute.xlu0 %132
      %136 = vset.pattern.permute.xlu0 0
      %137 = vperm.xlu0 %136, %v37
      %v138 = vpop.permute.xlu0 %137
      %141 = vset.pattern.permute.xlu0 0
      %142 = vperm.xlu0 %141, %v38
      %v143 = vpop.permute.xlu0 %142
      %146 = vset.pattern.permute.xlu0 0
      %147 = vperm.xlu0 %146, %v39
      %v148 = vpop.permute.xlu0 %147
      %v150 = vadd.f32 %v133, %v114
      %v151 = vadd.f32 %v133, %v115
      %v152 = vadd.f32 %v133, %v116
      %v153 = vadd.f32 %v133, %v117
      %v154 = vadd.f32 %v138, %v118
      %v155 = vadd.f32 %v138, %v119
      %v156 = vadd.f32 %v138, %v120
      %v157 = vadd.f32 %v138, %v121
      %v158 = vadd.f32 %v143, %v122
      %v159 = vadd.f32 %v143, %v123
      %v160 = vadd.f32 %v143, %v124
      %v161 = vadd.f32 %v143, %v125
      %v162 = vadd.f32 %v148, %v126
      %v163 = vadd.f32 %v148, %v127
      %v164 = vadd.f32 %v148, %v128
      %v165 = vadd.f32 %v148, %v129
      %166 = vset.pattern.permute.xlu0 1
      %167 = vperm.xlu0 %166, %v27
      %v168 = vpop.permute.xlu0 %167
      %170 = vset.pattern.permute.xlu0 1
      %171 = vperm.xlu0 %170, %v28
      %v172 = vpop.permute.xlu0 %171
      %174 = vset.pattern.permute.xlu0 1
      %175 = vperm.xlu0 %174, %v29
      %v176 = vpop.permute.xlu0 %175
      %178 = vset.pattern.permute.xlu0 1
      %179 = vperm.xlu0 %178, %v30
      %v180 = vpop.permute.xlu0 %179
      %v182 = vlaneseq
      %v183 = vshrl.u32 %v182, 7
      %v184 = vsub.s32 1, %v183
      %v185 = vrot.slane %v56, %v184
      %v186 = vlaneseq
      %v187 = vshrl.u32 %v186, 7
      %v188 = vsub.s32 3, %v187
      %v189 = vrot.slane %v56, %v188
      %v190 = vlaneseq
      %v191 = vshrl.u32 %v190, 7
      %v192 = vsub.s32 5, %v191
      %v193 = vrot.slane %v56, %v192
      %v194 = vlaneseq
      %v195 = vshrl.u32 %v194, 7
      %v196 = vsub.s32 7, %v195
      %v197 = vrot.slane %v56, %v196
      %v202 = vlaneseq
      %v203 = vshrl.u32 %v202, 7
      %v204 = vsub.s32 1, %v203
      %v205 = vrot.slane %v185, %v204
      %v206 = vlaneseq
      %v207 = vshrl.u32 %v206, 7
      %v208 = vsub.s32 1, %v207
      %v209 = vrot.slane %v189, %v208
      %v210 = vlaneseq
      %v211 = vshrl.u32 %v210, 7
      %v212 = vsub.s32 1, %v211
      %v213 = vrot.slane %v193, %v212
      %v214 = vlaneseq
      %v215 = vshrl.u32 %v214, 7
      %v216 = vsub.s32 1, %v215
      %v217 = vrot.slane %v197, %v216
      %v218 = vmul.f32 %v168, %v205
      %v219 = vmul.f32 %v168, %v209
      %v220 = vmul.f32 %v168, %v213
      %v221 = vmul.f32 %v168, %v217
      %v222 = vmul.f32 %v172, %v205
      %v223 = vmul.f32 %v172, %v209
      %v224 = vmul.f32 %v172, %v213
      %v225 = vmul.f32 %v172, %v217
      %v226 = vmul.f32 %v176, %v205
      %v227 = vmul.f32 %v176, %v209
      %v228 = vmul.f32 %v176, %v213
      %v229 = vmul.f32 %v176, %v217
      %v230 = vmul.f32 %v180, %v205
      %v231 = vmul.f32 %v180, %v209
      %v232 = vmul.f32 %v180, %v213
      %v233 = vmul.f32 %v180, %v217
      %v234 = vadd.f32 %v150, %v218
      %v235 = vadd.f32 %v151, %v219
      %v236 = vadd.f32 %v152, %v220
      %v237 = vadd.f32 %v153, %v221
      %v238 = vadd.f32 %v154, %v222
      %v239 = vadd.f32 %v155, %v223
      %v240 = vadd.f32 %v156, %v224
      %v241 = vadd.f32 %v157, %v225
      %v242 = vadd.f32 %v158, %v226
      %v243 = vadd.f32 %v159, %v227
      %v244 = vadd.f32 %v160, %v228
      %v245 = vadd.f32 %v161, %v229
      %v246 = vadd.f32 %v162, %v230
      %v247 = vadd.f32 %v163, %v231
      %v248 = vadd.f32 %v164, %v232
      %v249 = vadd.f32 %v165, %v233
      %v250 = vmax.f32 %v234, 0.0
      %v251 = vmax.f32 %v235, 0.0
      %v252 = vmax.f32 %v236, 0.0
      %v253 = vmax.f32 %v237, 0.0
      %v254 = vmax.f32 %v238, 0.0
      %v255 = vmax.f32 %v239, 0.0
      %v256 = vmax.f32 %v240, 0.0
      %v257 = vmax.f32 %v241, 0.0
      %v258 = vmax.f32 %v242, 0.0
      %v259 = vmax.f32 %v243, 0.0
      %v260 = vmax.f32 %v244, 0.0
      %v261 = vmax.f32 %v245, 0.0
      %v262 = vmax.f32 %v246, 0.0
      %v263 = vmax.f32 %v247, 0.0
      %v264 = vmax.f32 %v248, 0.0
      %v265 = vmax.f32 %v249, 0.0
      %267 = vset.pattern.permute.xlu0 0
      %268 = vperm.xlu0 %267, %v40
      %v269 = vpop.permute.xlu0 %268
      %272 = vset.pattern.permute.xlu0 0
      %273 = vperm.xlu0 %272, %v41
      %v274 = vpop.permute.xlu0 %273
      %277 = vset.pattern.permute.xlu0 0
      %278 = vperm.xlu0 %277, %v42
      %v279 = vpop.permute.xlu0 %278
      %282 = vset.pattern.permute.xlu0 0
      %283 = vperm.xlu0 %282, %v43
      %v284 = vpop.permute.xlu0 %283
      %vm286 = vcmask 261120
      %v288 = vsel %vm286, %v31, 0
      %v291 = vsel %vm286, %v32, 0
      %v294 = vsel %vm286, %v33, 0
      %v297 = vsel %vm286, %v34, 0
      %299 = vmatprep.subr.mxu0 %v251
      %300 = vmatpush1.msra.mxu0 %v250
      %301 = vmatprep.subr.mxu0 %v255
      %302 = vmatpush1.msra.mxu0 %v254
      %303 = vmatprep.subr.mxu0 %v259
      %304 = vmatpush1.msra.mxu0 %v258
      %305 = vmatprep.subr.mxu0 %v263
      %306 = vmatpush1.msra.mxu0 %v262
      %307 = vmatprep.subr.mxu0 0.0
      %308 = vmatpush1.msra.mxu0 0.0
      %309 = vmatprep.subr.mxu0 0.0
      %310 = vmatpush1.msra.mxu0 0.0
      %311 = vmatprep.subr.mxu0 0.0
      %312 = vmatpush1.msra.mxu0 0.0
      %313 = vmatprep.subr.mxu0 0.0
      %314 = vmatpush1.msra.mxu0 0.0
      %315 = vmatprep.subr.mxu0 0.0
      %316 = vmatpush1.msra.mxu0 0.0
      %317 = vmatprep.subr.mxu0 0.0
      %318 = vmatpush1.msra.mxu0 0.0
      %319 = vmatprep.subr.mxu0 0.0
      %320 = vmatpush1.msra.mxu0 0.0
      %321 = vmatprep.subr.mxu0 0.0
      %322 = vmatpush1.msra.mxu0 0.0
      %323 = vmatprep.subr.mxu0 0.0
      %324 = vmatpush1.msra.mxu0 0.0
      %325 = vmatprep.subr.mxu0 0.0
      %326 = vmatpush1.msra.mxu0 0.0
      %327 = vmatprep.subr.mxu0 0.0
      %328 = vmatpush1.msra.mxu0 0.0
      %329 = vmatprep.subr.mxu0 0.0
      %330 = vmatpush1.msra.mxu0 0.0
      %331 = vmatprep.subr.mxu0 0.0
      %332 = vmatpush1.msra.mxu0 0.0
      %333 = vmatprep.subr.mxu0 0.0
      %334 = vmatpush1.msra.mxu0 0.0
      %335 = vmatprep.subr.mxu0 0.0
      %336 = vmatpush1.msra.mxu0 0.0
      %337 = vmatprep.subr.mxu0 0.0
      %338 = vmatpush1.msra.mxu0 0.0
      %339 = vmatprep.subr.mxu0 0.0
      %340 = vmatpush1.msra.mxu0 0.0
      %341 = vmatprep.subr.mxu0 0.0
      %342 = vmatpush1.msra.mxu0 0.0
      %343 = vmatprep.subr.mxu0 0.0
      %344 = vmatpush1.msra.mxu0 0.0
      %345 = vmatprep.subr.mxu0 0.0
      %346 = vmatpush1.msra.mxu0 0.0
      %347 = vmatprep.subr.mxu0 0.0
      %348 = vmatpush1.msra.mxu0 0.0
      %349 = vmatprep.subr.mxu0 0.0
      %350 = vmatpush1.msra.mxu0 0.0
      %351 = vmatprep.subr.mxu0 0.0
      %352 = vmatpush1.msra.mxu0 0.0
      %353 = vmatprep.subr.mxu0 0.0
      %354 = vmatpush1.msra.mxu0 0.0
      %355 = vmatprep.subr.mxu0 0.0
      %356 = vmatpush1.msra.mxu0 0.0
      %357 = vmatprep.subr.mxu0 0.0
      %358 = vmatpush1.msra.mxu0 0.0
      %359 = vmatprep.subr.mxu0 0.0
      %360 = vmatpush1.msra.mxu0 0.0
      %361 = vmatprep.subr.mxu0 0.0
      %362 = vmatpush1.msra.mxu0 0.0
      %363 = vmatprep.mubr.f32.mxu0 0.0
      %364 = vmatmul.mubr.f32.gmra.mrb[0].mxu0 %v288
      %v365 = vpop.f32.mrb[0].mxu0
      %v366 = vadd.f32 %v269, %v365
      %v367 = vpop.f32.mrb[0].mxu0
      %v368 = vadd.f32 %v269, %v367
      %369 = vmatprep.mubr.f32.mxu0 0.0
      %370 = vmatmul.mubr.f32.gmra.mrb[0].mxu0 %v291
      %v371 = vpop.f32.mrb[0].mxu0
      %v372 = vadd.f32 %v274, %v371
      %v373 = vpop.f32.mrb[0].mxu0
      %v374 = vadd.f32 %v274, %v373
      %375 = vmatprep.mubr.f32.mxu0 0.0
      %376 = vmatmul.mubr.f32.gmra.mrb[0].mxu0 %v294
      %v377 = vpop.f32.mrb[0].mxu0
      %v378 = vadd.f32 %v279, %v377
      %v379 = vpop.f32.mrb[0].mxu0
      %v380 = vadd.f32 %v279, %v379
      %381 = vmatprep.mubr.f32.mxu0 0.0
      %382 = vmatmul.mubr.f32.gmra.mrb[0].mxu0 %v297
      %v383 = vpop.f32.mrb[0].mxu0
      %v384 = vadd.f32 %v284, %v383
      %v385 = vpop.f32.mrb[0].mxu0
      %v386 = vadd.f32 %v284, %v385
      %387 = vdwg.mxu0
      %388 = vmatprep.subr.mxu0 %v253
      %389 = vmatpush1.msra.mxu0 %v252
      %390 = vmatprep.subr.mxu0 %v257
      %391 = vmatpush1.msra.mxu0 %v256
      %392 = vmatprep.subr.mxu0 %v261
      %393 = vmatpush1.msra.mxu0 %v260
      %394 = vmatprep.subr.mxu0 %v265
      %395 = vmatpush1.msra.mxu0 %v264
      %396 = vmatprep.subr.mxu0 0.0
      %397 = vmatpush1.msra.mxu0 0.0
      %398 = vmatprep.subr.mxu0 0.0
      %399 = vmatpush1.msra.mxu0 0.0
      %400 = vmatprep.subr.mxu0 0.0
      %401 = vmatpush1.msra.mxu0 0.0
      %402 = vmatprep.subr.mxu0 0.0
      %403 = vmatpush1.msra.mxu0 0.0
      %404 = vmatprep.subr.mxu0 0.0
      %405 = vmatpush1.msra.mxu0 0.0
      %406 = vmatprep.subr.mxu0 0.0
      %407 = vmatpush1.msra.mxu0 0.0
      %408 = vmatprep.subr.mxu0 0.0
      %409 = vmatpush1.msra.mxu0 0.0
      %410 = vmatprep.subr.mxu0 0.0
      %411 = vmatpush1.msra.mxu0 0.0
      %412 = vmatprep.subr.mxu0 0.0
      %413 = vmatpush1.msra.mxu0 0.0
      %414 = vmatprep.subr.mxu0 0.0
      %415 = vmatpush1.msra.mxu0 0.0
      %416 = vmatprep.subr.mxu0 0.0
      %417 = vmatpush1.msra.mxu0 0.0
      %418 = vmatprep.subr.mxu0 0.0
      %419 = vmatpush1.msra.mxu0 0.0
      %420 = vmatprep.subr.mxu0 0.0
      %421 = vmatpush1.msra.mxu0 0.0
      %422 = vmatprep.subr.mxu0 0.0
      %423 = vmatpush1.msra.mxu0 0.0
      %424 = vmatprep.subr.mxu0 0.0
      %425 = vmatpush1.msra.mxu0 0.0
      %426 = vmatprep.subr.mxu0 0.0
      %427 = vmatpush1.msra.mxu0 0.0
      %428 = vmatprep.subr.mxu0 0.0
      %429 = vmatpush1.msra.mxu0 0.0
      %430 = vmatprep.subr.mxu0 0.0
      %431 = vmatpush1.msra.mxu0 0.0
      %432 = vmatprep.subr.mxu0 0.0
      %433 = vmatpush1.msra.mxu0 0.0
      %434 = vmatprep.subr.mxu0 0.0
      %435 = vmatpush1.msra.mxu0 0.0
      %436 = vmatprep.subr.mxu0 0.0
      %437 = vmatpush1.msra.mxu0 0.0
      %438 = vmatprep.subr.mxu0 0.0
      %439 = vmatpush1.msra.mxu0 0.0
      %440 = vmatprep.subr.mxu0 0.0
      %441 = vmatpush1.msra.mxu0 0.0
      %442 = vmatprep.subr.mxu0 0.0
      %443 = vmatpush1.msra.mxu0 0.0
      %444 = vmatprep.subr.mxu0 0.0
      %445 = vmatpush1.msra.mxu0 0.0
      %446 = vmatprep.subr.mxu0 0.0
      %447 = vmatpush1.msra.mxu0 0.0
      %448 = vmatprep.subr.mxu0 0.0
      %449 = vmatpush1.msra.mxu0 0.0
      %450 = vmatprep.subr.mxu0 0.0
      %451 = vmatpush1.msra.mxu0 0.0
      %452 = vmatprep.mubr.f32.mxu0 0.0
      %453 = vmatmul.mubr.f32.gmra.mrb[0].mxu0 %v288
      %v454 = vpop.f32.mrb[0].mxu0
      %v455 = vadd.f32 %v269, %v454
      %v456 = vpop.f32.mrb[0].mxu0
      %v457 = vadd.f32 %v269, %v456
      %458 = vmatprep.mubr.f32.mxu0 0.0
      %459 = vmatmul.mubr.f32.gmra.mrb[0].mxu0 %v291
      %v460 = vpop.f32.mrb[0].mxu0
      %v461 = vadd.f32 %v274, %v460
      %v462 = vpop.f32.mrb[0].mxu0
      %v463 = vadd.f32 %v274, %v462
      %464 = vmatprep.mubr.f32.mxu0 0.0
      %465 = vmatmul.mubr.f32.gmra.mrb[0].mxu0 %v294
      %v466 = vpop.f32.mrb[0].mxu0
      %v467 = vadd.f32 %v279, %v466
      %v468 = vpop.f32.mrb[0].mxu0
      %v469 = vadd.f32 %v279, %v468
      %470 = vmatprep.mubr.f32.mxu0 0.0
      %471 = vmatmul.mubr.f32.gmra.mrb[0].mxu0 %v297
      %v472 = vpop.f32.mrb[0].mxu0
      %v473 = vadd.f32 %v284, %v472
      %v474 = vpop.f32.mrb[0].mxu0
      %v475 = vadd.f32 %v284, %v474
      %476 = vdwg.mxu0
      %v477 = vmax.f32 %v366, 0.0
      %v478 = vmax.f32 %v368, 0.0
      %v479 = vmax.f32 %v455, 0.0
      %v480 = vmax.f32 %v457, 0.0
      %v481 = vmax.f32 %v372, 0.0
      %v482 = vmax.f32 %v374, 0.0
      %v483 = vmax.f32 %v461, 0.0
      %v484 = vmax.f32 %v463, 0.0
      %v485 = vmax.f32 %v378, 0.0
      %v486 = vmax.f32 %v380, 0.0
      %v487 = vmax.f32 %v467, 0.0
      %v488 = vmax.f32 %v469, 0.0
      %v489 = vmax.f32 %v384, 0.0
      %v490 = vmax.f32 %v386, 0.0
      %v491 = vmax.f32 %v473, 0.0
      %v492 = vmax.f32 %v475, 0.0
      %494 = vset.pattern.permute.xlu0 0
      %495 = vperm.xlu0 %494, %v44
      %v496 = vpop.permute.xlu0 %495
      %v499 = vsel %vm286, %v35, 0
      %501 = vmatprep.subr.mxu0 %v478
      %502 = vmatpush1.msra.mxu0 %v477
      %503 = vmatprep.subr.mxu0 %v482
      %504 = vmatpush1.msra.mxu0 %v481
      %505 = vmatprep.subr.mxu0 %v486
      %506 = vmatpush1.msra.mxu0 %v485
      %507 = vmatprep.subr.mxu0 %v490
      %508 = vmatpush1.msra.mxu0 %v489
      %509 = vmatprep.subr.mxu0 0.0
      %510 = vmatpush1.msra.mxu0 0.0
      %511 = vmatprep.subr.mxu0 0.0
      %512 = vmatpush1.msra.mxu0 0.0
      %513 = vmatprep.subr.mxu0 0.0
      %514 = vmatpush1.msra.mxu0 0.0
      %515 = vmatprep.subr.mxu0 0.0
      %516 = vmatpush1.msra.mxu0 0.0
      %517 = vmatprep.subr.mxu0 0.0
      %518 = vmatpush1.msra.mxu0 0.0
      %519 = vmatprep.subr.mxu0 0.0
      %520 = vmatpush1.msra.mxu0 0.0
      %521 = vmatprep.subr.mxu0 0.0
      %522 = vmatpush1.msra.mxu0 0.0
      %523 = vmatprep.subr.mxu0 0.0
      %524 = vmatpush1.msra.mxu0 0.0
      %525 = vmatprep.subr.mxu0 0.0
      %526 = vmatpush1.msra.mxu0 0.0
      %527 = vmatprep.subr.mxu0 0.0
      %528 = vmatpush1.msra.mxu0 0.0
      %529 = vmatprep.subr.mxu0 0.0
      %530 = vmatpush1.msra.mxu0 0.0
      %531 = vmatprep.subr.mxu0 0.0
      %532 = vmatpush1.msra.mxu0 0.0
      %533 = vmatprep.subr.mxu0 0.0
      %534 = vmatpush1.msra.mxu0 0.0
      %535 = vmatprep.subr.mxu0 0.0
      %536 = vmatpush1.msra.mxu0 0.0
      %537 = vmatprep.subr.mxu0 0.0
      %538 = vmatpush1.msra.mxu0 0.0
      %539 = vmatprep.subr.mxu0 0.0
      %540 = vmatpush1.msra.mxu0 0.0
      %541 = vmatprep.subr.mxu0 0.0
      %542 = vmatpush1.msra.mxu0 0.0
      %543 = vmatprep.subr.mxu0 0.0
      %544 = vmatpush1.msra.mxu0 0.0
      %545 = vmatprep.subr.mxu0 0.0
      %546 = vmatpush1.msra.mxu0 0.0
      %547 = vmatprep.subr.mxu0 0.0
      %548 = vmatpush1.msra.mxu0 0.0
      %549 = vmatprep.subr.mxu0 0.0
      %550 = vmatpush1.msra.mxu0 0.0
      %551 = vmatprep.subr.mxu0 0.0
      %552 = vmatpush1.msra.mxu0 0.0
      %553 = vmatprep.subr.mxu0 0.0
      %554 = vmatpush1.msra.mxu0 0.0
      %555 = vmatprep.subr.mxu0 0.0
      %556 = vmatpush1.msra.mxu0 0.0
      %557 = vmatprep.subr.mxu0 0.0
      %558 = vmatpush1.msra.mxu0 0.0
      %559 = vmatprep.subr.mxu0 0.0
      %560 = vmatpush1.msra.mxu0 0.0
      %561 = vmatprep.subr.mxu0 0.0
      %562 = vmatpush1.msra.mxu0 0.0
      %563 = vmatprep.subr.mxu0 0.0
      %564 = vmatpush1.msra.mxu0 0.0
      %565 = vmatprep.mubr.f32.mxu0 0.0
      %566 = vmatmul.mubr.f32.gmra.mrb[0].mxu0 %v499
      %v567 = vpop.f32.mrb[0].mxu0
      %v568 = vadd.f32 %v496, %v567
      %v569 = vpop.f32.mrb[0].mxu0
      %v570 = vadd.f32 %v496, %v569
      %571 = vdwg.mxu0
      %572 = vmatprep.subr.mxu0 %v480
      %573 = vmatpush1.msra.mxu0 %v479
      %574 = vmatprep.subr.mxu0 %v484
      %575 = vmatpush1.msra.mxu0 %v483
      %576 = vmatprep.subr.mxu0 %v488
      %577 = vmatpush1.msra.mxu0 %v487
      %578 = vmatprep.subr.mxu0 %v492
      %579 = vmatpush1.msra.mxu0 %v491
      %580 = vmatprep.subr.mxu0 0.0
      %581 = vmatpush1.msra.mxu0 0.0
      %582 = vmatprep.subr.mxu0 0.0
      %583 = vmatpush1.msra.mxu0 0.0
      %584 = vmatprep.subr.mxu0 0.0
      %585 = vmatpush1.msra.mxu0 0.0
      %586 = vmatprep.subr.mxu0 0.0
      %587 = vmatpush1.msra.mxu0 0.0
      %588 = vmatprep.subr.mxu0 0.0
      %589 = vmatpush1.msra.mxu0 0.0
      %590 = vmatprep.subr.mxu0 0.0
      %591 = vmatpush1.msra.mxu0 0.0
      %592 = vmatprep.subr.mxu0 0.0
      %593 = vmatpush1.msra.mxu0 0.0
      %594 = vmatprep.subr.mxu0 0.0
      %595 = vmatpush1.msra.mxu0 0.0
      %596 = vmatprep.subr.mxu0 0.0
      %597 = vmatpush1.msra.mxu0 0.0
      %598 = vmatprep.subr.mxu0 0.0
      %599 = vmatpush1.msra.mxu0 0.0
      %600 = vmatprep.subr.mxu0 0.0
      %601 = vmatpush1.msra.mxu0 0.0
      %602 = vmatprep.subr.mxu0 0.0
      %603 = vmatpush1.msra.mxu0 0.0
      %604 = vmatprep.subr.mxu0 0.0
      %605 = vmatpush1.msra.mxu0 0.0
      %606 = vmatprep.subr.mxu0 0.0
      %607 = vmatpush1.msra.mxu0 0.0
      %608 = vmatprep.subr.mxu0 0.0
      %609 = vmatpush1.msra.mxu0 0.0
      %610 = vmatprep.subr.mxu0 0.0
      %611 = vmatpush1.msra.mxu0 0.0
      %612 = vmatprep.subr.mxu0 0.0
      %613 = vmatpush1.msra.mxu0 0.0
      %614 = vmatprep.subr.mxu0 0.0
      %615 = vmatpush1.msra.mxu0 0.0
      %616 = vmatprep.subr.mxu0 0.0
      %617 = vmatpush1.msra.mxu0 0.0
      %618 = vmatprep.subr.mxu0 0.0
      %619 = vmatpush1.msra.mxu0 0.0
      %620 = vmatprep.subr.mxu0 0.0
      %621 = vmatpush1.msra.mxu0 0.0
      %622 = vmatprep.subr.mxu0 0.0
      %623 = vmatpush1.msra.mxu0 0.0
      %624 = vmatprep.subr.mxu0 0.0
      %625 = vmatpush1.msra.mxu0 0.0
      %626 = vmatprep.subr.mxu0 0.0
      %627 = vmatpush1.msra.mxu0 0.0
      %628 = vmatprep.subr.mxu0 0.0
      %629 = vmatpush1.msra.mxu0 0.0
      %630 = vmatprep.subr.mxu0 0.0
      %631 = vmatpush1.msra.mxu0 0.0
      %632 = vmatprep.subr.mxu0 0.0
      %633 = vmatpush1.msra.mxu0 0.0
      %634 = vmatprep.subr.mxu0 0.0
      %635 = vmatpush1.msra.mxu0 0.0
      %636 = vmatprep.mubr.f32.mxu0 0.0
      %637 = vmatmul.mubr.f32.gmra.mrb[0].mxu0 %v499
      %v638 = vpop.f32.mrb[0].mxu0
      %v639 = vadd.f32 %v496, %v638
      %v640 = vpop.f32.mrb[0].mxu0
      %v641 = vadd.f32 %v496, %v640
      %642 = vdwg.mxu0
      %v647 = vcombine.low %v568, %v570
      %v648 = vcombine.low %v639, %v641
      %s651 = smul.addr %s52, 4
      %s652 = scalar_lea.vmem [#allocation2], %s651
      %653 = vst [vmem:[%s652] sm:$0x77] %v647
      %654 = vst [vmem:[%s652 + $0x8] sm:$0x77] %v648
    $region34: #{tpu_custom_call.1} parent=1 // loop_footer
      %s50 = sadd.s32 1, %s46
    $region35: #{tpu_custom_call.1} parent=1 // loop_footer_branch
      %45 = sbr.rel target = $region31
    $region36: #{tpu_custom_call.1} parent=1 // loop_exit
      _
    // Predicated region
    $region37: #{tpu_custom_call.1} parent=1 // pred_check
      _
    $region38: #{tpu_custom_call.1} parent=1 // pred_check_branch
      %656 = sbr.rel (0) target = $region40
    $region39: #{tpu_custom_call.1} parent=1 // pred_region
      %s658 = ssub.s32 512, 512
      %659 = vsyncadd [#allocation3], %s658
      %s661 = sshll.u32 [#allocation2], 4
      %s662 = int_to_ptr.vmem [resolvable:$true] %s661
      %664 = dma.vmem_to_hbm [thread:$0]  %s662, 512, %s7, [#allocation3]
    $region40: #{tpu_custom_call.1} parent=1 // pred_fallthru
      _
    // Predicated region
    $region41: #{tpu_custom_call.1} parent=1 // pred_check
      _
    $region42: #{tpu_custom_call.1} parent=1 // pred_check_branch
      %666 = sbr.rel (0) target = $region44
    $region43: #{tpu_custom_call.1} parent=1 // pred_region
      %667 = dma.done [#allocation3], 512
    $region44: #{tpu_custom_call.1} parent=1 // pred_fallthru
      _
    %668 = vsyncpa [#allocation3], 1

</llo_original>
